<compile_context>
chip_gen: v5e
topology: v5e:2x2
jax: 0.10.0
libtpu: 0.0.40
codegen_flags: <defaults>
</compile_context>

<pallas_src>
import functools

import jax
import jax.numpy as jnp
import numpy as np
from jax.experimental import pallas as pl
from jax.experimental.pallas import tpu as pltpu

EPS = 1e-5
NEG_BIG = -1e30


# ---------------------------------------------------------------------------
# Fused forward kernel
# ---------------------------------------------------------------------------
def fused_forward_kernel(tok_ref, slab_ref, out_ref, *, layout, seq_len, batch,
                         hidden, n_mlp):
    """Entire eval-mode forward for both sentences in one kernel.

    tok_ref:  (S*2B, 1) int32  token ids, rows ordered t*2B + b
                               (b < B -> sentence1, b >= B -> sentence2)
    slab_ref: (N, 128) f32     all weights packed lane-dense; `layout` maps
                               name -> (row_lo, rows, cols), row_lo % 8 == 0
    out_ref:  (2B, 128) f32    padded log-probs (cols >= d_out are junk;
                               rows >= B are the swapped-sentence rows, junk)
    """
    H = hidden
    TB = 2 * batch
    SB = tok_ref.shape[0]
    vpad = layout["table"][1]           # vocab padded to a multiple of 128

    def view(name):
        lo, r, c = layout[name]
        return slab_ref[lo:lo + r, 0:c]

    def view_rows(name, r0, r1):
        lo, _, c = layout[name]
        return slab_ref[lo + r0:lo + r1, 0:c]

    # ---- embedding lookup as a one-hot matmul against the padded table ----
    tok = tok_ref[...]                                              # (SB, 1) i32
    ids = jax.lax.broadcasted_iota(jnp.int32, (SB, vpad), 1)        # (SB, V)
    onehot = (tok == ids).astype(jnp.float32)                       # (SB, V)
    emb = jnp.dot(onehot, view("table"),
                  preferred_element_type=jnp.float32)               # (SB, d_embed)

    # ---- projection + embed_bn + W_ih folded; all timesteps in one matmul --
    # (candidate-gate columns of w_eg / b_g / w_hh are pre-scaled x2 host-side)
    gates_x = jnp.dot(emb, view("w_eg"),
                      preferred_element_type=jnp.float32) + view("b_g")  # (SB, 4H)

    # ---- LSTM recurrence, fully unrolled, h/c carried as values -----------
    whh = view("w_hh")                                              # (H, 4H)
    h = jnp.zeros((TB, H), jnp.float32)
    c = jnp.zeros((TB, H), jnp.float32)
    for t in range(seq_len):                    # static unroll, S is small
        g = gates_x[t * TB:(t + 1) * TB, :] + jnp.dot(
            h, whh, preferred_element_type=jnp.float32)             # (TB, 4H)
        a = jax.nn.sigmoid(g)                   # ONE full-vreg EUP push
        i_g = a[:, 0 * H:1 * H]
        f_g = a[:, 1 * H:2 * H]
        g_g = 2.0 * a[:, 2 * H:3 * H] - 1.0     # tanh(x) = 2*sigmoid(2x) - 1
        o_g = a[:, 3 * H:4 * H]
        c = f_g * c + i_g * g_g
        h = o_g * jnp.tanh(c)

    # ---- feature module + first MLP layer (feature_bn folded into w_mlp0) --
    # Half-rotate h along sublanes so rows [:B] of h2 hold sentence2 states
    # (same effect as pltpu.roll(h, shift=batch, axis=0) since TB == 2*batch).
    # The first MLP weight is consumed as four (H, d_mlp) row blocks, so the
    # [s1, s2, s1-s2, s1*s2] lane concatenation is never materialized.
    h2 = jnp.concatenate([h[batch:, :], h[:batch, :]], axis=0)      # (TB, H)
    x = (jnp.dot(h, view_rows("w_mlp0", 0, H),
                 preferred_element_type=jnp.float32)
         + jnp.dot(h2, view_rows("w_mlp0", H, 2 * H),
                   preferred_element_type=jnp.float32)
         + jnp.dot(h - h2, view_rows("w_mlp0", 2 * H, 3 * H),
                   preferred_element_type=jnp.float32)
         + jnp.dot(h * h2, view_rows("w_mlp0", 3 * H, 4 * H),
                   preferred_element_type=jnp.float32)
         + view("b_mlp0"))
    x = jnp.maximum(x, 0.0)

    # ---- remaining MLP layers (preceding BN folded into each Linear) ------
    for l in range(1, n_mlp):
        x = jnp.maximum(
            jnp.dot(x, view(f"w_mlp{l}"), preferred_element_type=jnp.float32)
            + view(f"b_mlp{l}"), 0.0)

    # ---- lane-dense padded head + log-softmax ------------------------------
    # Padded lanes carry bias = -1e30 -> exp underflows to 0, normalization of
    # the real d_out lanes is unchanged.
    y = jnp.dot(x, view("w_out"), preferred_element_type=jnp.float32) + view("b_out")
    m = jnp.max(y, axis=1, keepdims=True)
    z = y - m
    out_ref[...] = z - jnp.log(jnp.sum(jnp.exp(z), axis=1, keepdims=True))


# ---------------------------------------------------------------------------
# Wrapper
# ---------------------------------------------------------------------------
def paraphrase_forward_fused(cfg, fused, sentence1, sentence2):
    """sentence1/sentence2: (seq, batch) int32 -> (batch, d_out) log-probs."""
    S, B = sentence1.shape
    TB = 2 * B
    tok = jnp.concatenate([sentence1, sentence2], axis=1)            # (S, 2B)
    tok = tok.reshape(S * TB, 1).astype(jnp.int32)

    kernel = functools.partial(
        fused_forward_kernel,
        layout=fused["layout"], seq_len=S, batch=B,
        hidden=cfg.d_hidden, n_mlp=cfg.n_mlp_layers)

    padded = pl.pallas_call(
        kernel,
        out_shape=jax.ShapeDtypeStruct((TB, 128), jnp.float32),
        in_specs=[pl.BlockSpec(memory_space=pltpu.MemorySpace.VMEM),
                  pl.BlockSpec(memory_space=pltpu.MemorySpace.VMEM)],
        out_specs=pl.BlockSpec(memory_space=pltpu.MemorySpace.VMEM),
    )(tok, fused["slab"])

    return padded[:B, :cfg.d_out]


# ---------------------------------------------------------------------------
# Model config & raw parameters
# ---------------------------------------------------------------------------
class Config:
    n_embed = 100
    d_embed = 32
    d_proj = 32
    projection = True
    fix_emb = True
    d_hidden = 32
    n_layers = 1
    birnn = False
    spinn = False
    d_mlp = 32
    d_out = 3
    n_mlp_layers = 2
    embed_dropout = 0.1   # eval mode -> identity
    mlp_dropout = 0.1     # eval mode -> identity
    rnn_dropout = 0.0
    n_cells = 1


def init_params(cfg, key):
    ks = iter(jax.random.split(key, 64))

    def rand(shape, scale=0.1):
        return (scale * jax.random.normal(next(ks), shape)).astype(jnp.float32)

    def bn(size):
        return dict(gamma=rand((1, size)) + 1.0,
                    beta=rand((1, size)),
                    mean=rand((1, size)),
                    var=jnp.abs(rand((1, size))) + 1.0)

    H = cfg.d_hidden
    feat_in = H * (2 if (cfg.birnn and not cfg.spinn) else 1)
    mlp_in = 4 * feat_in

    params = dict(
        embed=rand((cfg.n_embed, cfg.d_embed), 0.5),
        proj_w=rand((cfg.d_embed, cfg.d_proj)),        # stored (in, out)
        proj_b=rand((1, cfg.d_proj)),
        embed_bn=bn(cfg.d_proj),
        lstm_w_ih=rand((cfg.d_proj, 4 * H)),           # (in, 4H), gate order i,f,g,o
        lstm_w_hh=rand((H, 4 * H)),
        lstm_b=rand((1, 4 * H)),                       # b_ih + b_hh combined
        feature_bn=bn(4 * feat_in),
        mlp=[],
    )
    in_size = mlp_in
    for _ in range(cfg.n_mlp_layers):
        params["mlp"].append(dict(w=rand((in_size, cfg.d_mlp)),
                                  b=rand((1, cfg.d_mlp)),
                                  bn=bn(cfg.d_mlp)))
        in_size = cfg.d_mlp
    params["out_w"] = rand((cfg.d_mlp, cfg.d_out))
    params["out_b"] = rand((1, cfg.d_out))
    return params


# ---------------------------------------------------------------------------
# Host-side folding + weight-slab packing
# ---------------------------------------------------------------------------
def _bn_scale_shift(bn):
    s = bn["gamma"] / jnp.sqrt(bn["var"] + EPS)     # (1, d)
    return s, bn["beta"] - bn["mean"] * s


def _pack_slab(entries):
    """Pack (name, (rows, cols<=128) f32) tensors into one (N, 128) slab.

    Each tensor starts at a row offset that is a multiple of 8 (sublane tile
    aligned). Returns (slab jnp.ndarray, layout: name -> (row_lo, rows, cols)).
    """
    layout = {}
    row = 0
    for name, arr in entries:
        r, c = arr.shape
        assert c <= 128, f"{name}: cols {c} > 128"
        layout[name] = (row, r, c)
        row += -(-r // 8) * 8
    slab = np.zeros((max(row, 8), 128), np.float32)
    for name, arr in entries:
        lo, r, c = layout[name]
        slab[lo:lo + r, :c] = np.asarray(arr, np.float32)
    return jnp.asarray(slab), layout


def prepare_fused_params(cfg, p):
    """Fold eval-mode BatchNorms into adjacent Linears, fuse proj into W_ih,
    pre-scale candidate-gate columns x2, pad table/head, and pack everything
    into one lane-dense (N, 128) slab."""
    H = cfg.d_hidden

    # embed_bn folds into the projection (Linear -> BN: scale output columns)
    s, sh = _bn_scale_shift(p["embed_bn"])
    proj_w = p["proj_w"] * s
    proj_b = p["proj_b"] * s + sh
    # projection folds into the LSTM input transform (no nonlinearity between)
    w_eg = proj_w @ p["lstm_w_ih"]                       # (d_embed, 4H)
    b_g = proj_b @ p["lstm_w_ih"] + p["lstm_b"]          # (1, 4H)
    w_hh = p["lstm_w_hh"]                                # (H, 4H)

    # pre-scale candidate-gate columns by 2 -> in-kernel tanh(x)=2*sigmoid(2x)-1
    gcol = jnp.concatenate([jnp.ones((1, 2 * H), jnp.float32),
                            2.0 * jnp.ones((1, H), jnp.float32),
                            jnp.ones((1, H), jnp.float32)], axis=1)   # (1, 4H)
    w_eg = w_eg * gcol
    b_g = b_g * gcol
    w_hh = w_hh * gcol

    # pad vocab to a multiple of 128 for the in-kernel one-hot matmul
    V, D = p["embed"].shape
    Vp = max(128, ((V + 127) // 128) * 128)
    table = jnp.zeros((Vp, D), jnp.float32).at[:V].set(p["embed"])

    # feature_bn / post-ReLU BNs fold into the FOLLOWING Linear (scale rows)
    mlp = []
    prev_bn = p["feature_bn"]
    for layer in p["mlp"]:
        s, sh = _bn_scale_shift(prev_bn)
        w = layer["w"] * s.reshape(-1, 1)
        b = layer["b"] + sh @ layer["w"]
        mlp.append((w, b))
        prev_bn = layer["bn"]
    s, sh = _bn_scale_shift(prev_bn)
    w_out = p["out_w"] * s.reshape(-1, 1)
    b_out = p["out_b"] + sh @ p["out_w"]

    # pad the classifier head to 128 lanes; padded bias lanes forced to -1e30
    d_out = w_out.shape[1]
    w_out_p = jnp.zeros((w_out.shape[0], 128), jnp.float32).at[:, :d_out].set(w_out)
    b_out_p = jnp.full((1, 128), NEG_BIG, jnp.float32).at[:, :d_out].set(b_out)

    entries = [("table", table), ("w_eg", w_eg), ("b_g", b_g), ("w_hh", w_hh)]
    for l, (w, b) in enumerate(mlp):
        entries += [(f"w_mlp{l}", w), (f"b_mlp{l}", b)]
    entries += [("w_out", w_out_p), ("b_out", b_out_p)]

    slab, layout = _pack_slab(entries)
    return dict(slab=slab, layout=layout, d_out=d_out)


# ---------------------------------------------------------------------------
# Pure-JAX reference (unfolded; validates the kernel AND all the folding)
# ---------------------------------------------------------------------------
def _bn_eval(x, bn):
    return (x - bn["mean"]) / jnp.sqrt(bn["var"] + EPS) * bn["gamma"] + bn["beta"]


def reference_forward(cfg, params, sentence1, sentence2):
    def enc(tokens):
        S, B = tokens.shape
        emb = jnp.take(params["embed"], tokens.reshape(-1), axis=0)
        x = _bn_eval(emb @ params["proj_w"] + params["proj_b"], params["embed_bn"])
        x = x.reshape(S, B, cfg.d_proj)
        H = cfg.d_hidden
        h = jnp.zeros((B, H), jnp.float32)
        c = jnp.zeros((B, H), jnp.float32)
        for t in range(S):
            g = x[t] @ params["lstm_w_ih"] + h @ params["lstm_w_hh"] + params["lstm_b"]
            i = jax.nn.sigmoid(g[:, 0 * H:1 * H])
            f = jax.nn.sigmoid(g[:, 1 * H:2 * H])
            gg = jnp.tanh(g[:, 2 * H:3 * H])
            o = jax.nn.sigmoid(g[:, 3 * H:4 * H])
            c = f * c + i * gg
            h = o * jnp.tanh(c)
        return h

    s1, s2 = enc(sentence1), enc(sentence2)
    x = _bn_eval(jnp.concatenate([s1, s2, s1 - s2, s1 * s2], axis=1),
                 params["feature_bn"])
    for layer in params["mlp"]:
        x = _bn_eval(jnp.maximum(x @ layer["w"] + layer["b"], 0.0), layer["bn"])
    y = x @ params["out_w"] + params["out_b"]
    return jax.nn.log_softmax(y, axis=1)


# ---------------------------------------------------------------------------
if __name__ == "__main__":
    cfg = Config()
    key = jax.random.PRNGKey(0)
    kp, k1, k2 = jax.random.split(key, 3)

    params = init_params(cfg, kp)
    fused = prepare_fused_params(cfg, params)

    SEQ, BATCH = 8, 4
    sentence1 = jax.random.randint(k1, (SEQ, BATCH), 0, cfg.n_embed, dtype=jnp.int32)
    sentence2 = jax.random.randint(k2, (SEQ, BATCH), 0, cfg.n_embed, dtype=jnp.int32)

    fwd = jax.jit(lambda a, b: paraphrase_forward_fused(cfg, fused, a, b))
    scores = jax.block_until_ready(fwd(sentence1, sentence2))

    ref = jax.block_until_ready(reference_forward(cfg, params, sentence1, sentence2))
    np.testing.assert_allclose(np.asarray(scores), np.asarray(ref),
                               rtol=2e-3, atol=2e-3)

    assert scores.shape == (BATCH, cfg.d_out)
    print("KERNEL_OK")
</pallas_src>

<mosaic_0001>
module attributes {stable_mosaic.version = 11 : i64} {
  func.func @fused_forward_kernel(%arg0: memref<64x1xi32, #tpu.memory_space<vmem>>, %arg1: memref<416x128xf32, #tpu.memory_space<vmem>>, %arg2: memref<8x128xf32, #tpu.memory_space<vmem>>) attributes {dimension_semantics = [], scalar_prefetch = 0 : i64, scratch_operands = 0 : i64, tpu.core_type = #tpu.core_type<tc>} {
    %c0 = arith.constant 0 : index
    %c0_0 = arith.constant 0 : index
    %0 = vector.load %arg0[%c0, %c0_0] : memref<64x1xi32, #tpu.memory_space<vmem>>, vector<64x1xi32>
    %1 = tpu.iota {dimensions = array<i32: 1>} : vector<64x128xi32>
    %2 = vector.broadcast %0 : vector<64x1xi32> to vector<64x128xi32>
    %3 = arith.cmpi eq, %2, %1 : vector<64x128xi32>
    %4 = arith.extui %3 : vector<64x128xi1> to vector<64x128xi32>
    %5 = arith.sitofp %4 : vector<64x128xi32> to vector<64x128xf32>
    %c0_1 = arith.constant 0 : index
    %c0_2 = arith.constant 0 : index
    %6 = vector.load %arg1[%c0_1, %c0_2] : memref<416x128xf32, #tpu.memory_space<vmem>>, vector<128x32xf32>
    %cst = arith.constant dense<0.000000e+00> : vector<64x32xf32>
    %7 = tpu.matmul %5, %6, %cst {dimension_numbers = #tpu.dot_dimension_numbers<[1], [0], [0], [1], [0, 0, 1, 1], [], []>} : vector<64x128xf32>, vector<128x32xf32>, vector<64x32xf32> -> vector<64x32xf32>
    %c128 = arith.constant 128 : index
    %c0_3 = arith.constant 0 : index
    %8 = vector.load %arg1[%c128, %c0_3] : memref<416x128xf32, #tpu.memory_space<vmem>>, vector<32x128xf32>
    %cst_4 = arith.constant dense<0.000000e+00> : vector<64x128xf32>
    %9 = tpu.matmul %7, %8, %cst_4 {dimension_numbers = #tpu.dot_dimension_numbers<[1], [0], [0], [1], [0, 0, 1, 1], [], []>} : vector<64x32xf32>, vector<32x128xf32>, vector<64x128xf32> -> vector<64x128xf32>
    %c160 = arith.constant 160 : index
    %c0_5 = arith.constant 0 : index
    %10 = vector.load %arg1[%c160, %c0_5] : memref<416x128xf32, #tpu.memory_space<vmem>>, vector<1x128xf32>
    %11 = vector.broadcast %10 : vector<1x128xf32> to vector<64x128xf32>
    %12 = arith.addf %9, %11 : vector<64x128xf32>
    %c168 = arith.constant 168 : index
    %c0_6 = arith.constant 0 : index
    %13 = vector.load %arg1[%c168, %c0_6] : memref<416x128xf32, #tpu.memory_space<vmem>>, vector<32x128xf32>
    %cst_7 = arith.constant 0.000000e+00 : f32
    %14 = vector.broadcast %cst_7 : f32 to vector<8x32xf32>
    %cst_8 = arith.constant 0.000000e+00 : f32
    %15 = vector.broadcast %cst_8 : f32 to vector<8x32xf32>
    %16 = vector.extract_strided_slice %12 {offsets = [0, 0], sizes = [8, 128], strides = [1, 1]} : vector<64x128xf32> to vector<8x128xf32>
    %cst_9 = arith.constant dense<0.000000e+00> : vector<8x128xf32>
    %17 = tpu.matmul %14, %13, %cst_9 {dimension_numbers = #tpu.dot_dimension_numbers<[1], [0], [0], [1], [0, 0, 1, 1], [], []>} : vector<8x32xf32>, vector<32x128xf32>, vector<8x128xf32> -> vector<8x128xf32>
    %18 = arith.addf %16, %17 : vector<8x128xf32>
    %19 = arith.negf %18 : vector<8x128xf32>
    %20 = math.exp %19 : vector<8x128xf32>
    %cst_10 = arith.constant 1.000000e+00 : f32
    %21 = vector.broadcast %cst_10 : f32 to vector<8x128xf32>
    %22 = arith.addf %21, %20 : vector<8x128xf32>
    %23 = arith.divf %21, %22 : vector<8x128xf32>
    %24 = vector.extract_strided_slice %23 {offsets = [0, 0], sizes = [8, 32], strides = [1, 1]} : vector<8x128xf32> to vector<8x32xf32>
    %25 = vector.extract_strided_slice %23 {offsets = [0, 32], sizes = [8, 32], strides = [1, 1]} : vector<8x128xf32> to vector<8x32xf32>
    %26 = vector.extract_strided_slice %23 {offsets = [0, 64], sizes = [8, 32], strides = [1, 1]} : vector<8x128xf32> to vector<8x32xf32>
    %cst_11 = arith.constant 2.000000e+00 : f32
    %27 = vector.broadcast %cst_11 : f32 to vector<8x32xf32>
    %28 = arith.mulf %27, %26 : vector<8x32xf32>
    %cst_12 = arith.constant 1.000000e+00 : f32
    %29 = vector.broadcast %cst_12 : f32 to vector<8x32xf32>
    %30 = arith.subf %28, %29 : vector<8x32xf32>
    %31 = vector.extract_strided_slice %23 {offsets = [0, 96], sizes = [8, 32], strides = [1, 1]} : vector<8x128xf32> to vector<8x32xf32>
    %32 = arith.mulf %25, %15 : vector<8x32xf32>
    %33 = arith.mulf %24, %30 : vector<8x32xf32>
    %34 = arith.addf %32, %33 : vector<8x32xf32>
    %35 = math.tanh %34 : vector<8x32xf32>
    %36 = arith.mulf %31, %35 : vector<8x32xf32>
    %37 = vector.extract_strided_slice %12 {offsets = [8, 0], sizes = [8, 128], strides = [1, 1]} : vector<64x128xf32> to vector<8x128xf32>
    %cst_13 = arith.constant dense<0.000000e+00> : vector<8x128xf32>
    %38 = tpu.matmul %36, %13, %cst_13 {dimension_numbers = #tpu.dot_dimension_numbers<[1], [0], [0], [1], [0, 0, 1, 1], [], []>} : vector<8x32xf32>, vector<32x128xf32>, vector<8x128xf32> -> vector<8x128xf32>
    %39 = arith.addf %37, %38 : vector<8x128xf32>
    %40 = arith.negf %39 : vector<8x128xf32>
    %41 = math.exp %40 : vector<8x128xf32>
    %cst_14 = arith.constant 1.000000e+00 : f32
    %42 = vector.broadcast %cst_14 : f32 to vector<8x128xf32>
    %43 = arith.addf %42, %41 : vector<8x128xf32>
    %44 = arith.divf %42, %43 : vector<8x128xf32>
    %45 = vector.extract_strided_slice %44 {offsets = [0, 0], sizes = [8, 32], strides = [1, 1]} : vector<8x128xf32> to vector<8x32xf32>
    %46 = vector.extract_strided_slice %44 {offsets = [0, 32], sizes = [8, 32], strides = [1, 1]} : vector<8x128xf32> to vector<8x32xf32>
    %47 = vector.extract_strided_slice %44 {offsets = [0, 64], sizes = [8, 32], strides = [1, 1]} : vector<8x128xf32> to vector<8x32xf32>
    %cst_15 = arith.constant 2.000000e+00 : f32
    %48 = vector.broadcast %cst_15 : f32 to vector<8x32xf32>
    %49 = arith.mulf %48, %47 : vector<8x32xf32>
    %cst_16 = arith.constant 1.000000e+00 : f32
    %50 = vector.broadcast %cst_16 : f32 to vector<8x32xf32>
    %51 = arith.subf %49, %50 : vector<8x32xf32>
    %52 = vector.extract_strided_slice %44 {offsets = [0, 96], sizes = [8, 32], strides = [1, 1]} : vector<8x128xf32> to vector<8x32xf32>
    %53 = arith.mulf %46, %34 : vector<8x32xf32>
    %54 = arith.mulf %45, %51 : vector<8x32xf32>
    %55 = arith.addf %53, %54 : vector<8x32xf32>
    %56 = math.tanh %55 : vector<8x32xf32>
    %57 = arith.mulf %52, %56 : vector<8x32xf32>
    %58 = vector.extract_strided_slice %12 {offsets = [16, 0], sizes = [8, 128], strides = [1, 1]} : vector<64x128xf32> to vector<8x128xf32>
    %cst_17 = arith.constant dense<0.000000e+00> : vector<8x128xf32>
    %59 = tpu.matmul %57, %13, %cst_17 {dimension_numbers = #tpu.dot_dimension_numbers<[1], [0], [0], [1], [0, 0, 1, 1], [], []>} : vector<8x32xf32>, vector<32x128xf32>, vector<8x128xf32> -> vector<8x128xf32>
    %60 = arith.addf %58, %59 : vector<8x128xf32>
    %61 = arith.negf %60 : vector<8x128xf32>
    %62 = math.exp %61 : vector<8x128xf32>
    %cst_18 = arith.constant 1.000000e+00 : f32
    %63 = vector.broadcast %cst_18 : f32 to vector<8x128xf32>
    %64 = arith.addf %63, %62 : vector<8x128xf32>
    %65 = arith.divf %63, %64 : vector<8x128xf32>
    %66 = vector.extract_strided_slice %65 {offsets = [0, 0], sizes = [8, 32], strides = [1, 1]} : vector<8x128xf32> to vector<8x32xf32>
    %67 = vector.extract_strided_slice %65 {offsets = [0, 32], sizes = [8, 32], strides = [1, 1]} : vector<8x128xf32> to vector<8x32xf32>
    %68 = vector.extract_strided_slice %65 {offsets = [0, 64], sizes = [8, 32], strides = [1, 1]} : vector<8x128xf32> to vector<8x32xf32>
    %cst_19 = arith.constant 2.000000e+00 : f32
    %69 = vector.broadcast %cst_19 : f32 to vector<8x32xf32>
    %70 = arith.mulf %69, %68 : vector<8x32xf32>
    %cst_20 = arith.constant 1.000000e+00 : f32
    %71 = vector.broadcast %cst_20 : f32 to vector<8x32xf32>
    %72 = arith.subf %70, %71 : vector<8x32xf32>
    %73 = vector.extract_strided_slice %65 {offsets = [0, 96], sizes = [8, 32], strides = [1, 1]} : vector<8x128xf32> to vector<8x32xf32>
    %74 = arith.mulf %67, %55 : vector<8x32xf32>
    %75 = arith.mulf %66, %72 : vector<8x32xf32>
    %76 = arith.addf %74, %75 : vector<8x32xf32>
    %77 = math.tanh %76 : vector<8x32xf32>
    %78 = arith.mulf %73, %77 : vector<8x32xf32>
    %79 = vector.extract_strided_slice %12 {offsets = [24, 0], sizes = [8, 128], strides = [1, 1]} : vector<64x128xf32> to vector<8x128xf32>
    %cst_21 = arith.constant dense<0.000000e+00> : vector<8x128xf32>
    %80 = tpu.matmul %78, %13, %cst_21 {dimension_numbers = #tpu.dot_dimension_numbers<[1], [0], [0], [1], [0, 0, 1, 1], [], []>} : vector<8x32xf32>, vector<32x128xf32>, vector<8x128xf32> -> vector<8x128xf32>
    %81 = arith.addf %79, %80 : vector<8x128xf32>
    %82 = arith.negf %81 : vector<8x128xf32>
    %83 = math.exp %82 : vector<8x128xf32>
    %cst_22 = arith.constant 1.000000e+00 : f32
    %84 = vector.broadcast %cst_22 : f32 to vector<8x128xf32>
    %85 = arith.addf %84, %83 : vector<8x128xf32>
    %86 = arith.divf %84, %85 : vector<8x128xf32>
    %87 = vector.extract_strided_slice %86 {offsets = [0, 0], sizes = [8, 32], strides = [1, 1]} : vector<8x128xf32> to vector<8x32xf32>
    %88 = vector.extract_strided_slice %86 {offsets = [0, 32], sizes = [8, 32], strides = [1, 1]} : vector<8x128xf32> to vector<8x32xf32>
    %89 = vector.extract_strided_slice %86 {offsets = [0, 64], sizes = [8, 32], strides = [1, 1]} : vector<8x128xf32> to vector<8x32xf32>
    %cst_23 = arith.constant 2.000000e+00 : f32
    %90 = vector.broadcast %cst_23 : f32 to vector<8x32xf32>
    %91 = arith.mulf %90, %89 : vector<8x32xf32>
    %cst_24 = arith.constant 1.000000e+00 : f32
    %92 = vector.broadcast %cst_24 : f32 to vector<8x32xf32>
    %93 = arith.subf %91, %92 : vector<8x32xf32>
    %94 = vector.extract_strided_slice %86 {offsets = [0, 96], sizes = [8, 32], strides = [1, 1]} : vector<8x128xf32> to vector<8x32xf32>
    %95 = arith.mulf %88, %76 : vector<8x32xf32>
    %96 = arith.mulf %87, %93 : vector<8x32xf32>
    %97 = arith.addf %95, %96 : vector<8x32xf32>
    %98 = math.tanh %97 : vector<8x32xf32>
    %99 = arith.mulf %94, %98 : vector<8x32xf32>
    %100 = vector.extract_strided_slice %12 {offsets = [32, 0], sizes = [8, 128], strides = [1, 1]} : vector<64x128xf32> to vector<8x128xf32>
    %cst_25 = arith.constant dense<0.000000e+00> : vector<8x128xf32>
    %101 = tpu.matmul %99, %13, %cst_25 {dimension_numbers = #tpu.dot_dimension_numbers<[1], [0], [0], [1], [0, 0, 1, 1], [], []>} : vector<8x32xf32>, vector<32x128xf32>, vector<8x128xf32> -> vector<8x128xf32>
    %102 = arith.addf %100, %101 : vector<8x128xf32>
    %103 = arith.negf %102 : vector<8x128xf32>
    %104 = math.exp %103 : vector<8x128xf32>
    %cst_26 = arith.constant 1.000000e+00 : f32
    %105 = vector.broadcast %cst_26 : f32 to vector<8x128xf32>
    %106 = arith.addf %105, %104 : vector<8x128xf32>
    %107 = arith.divf %105, %106 : vector<8x128xf32>
    %108 = vector.extract_strided_slice %107 {offsets = [0, 0], sizes = [8, 32], strides = [1, 1]} : vector<8x128xf32> to vector<8x32xf32>
    %109 = vector.extract_strided_slice %107 {offsets = [0, 32], sizes = [8, 32], strides = [1, 1]} : vector<8x128xf32> to vector<8x32xf32>
    %110 = vector.extract_strided_slice %107 {offsets = [0, 64], sizes = [8, 32], strides = [1, 1]} : vector<8x128xf32> to vector<8x32xf32>
    %cst_27 = arith.constant 2.000000e+00 : f32
    %111 = vector.broadcast %cst_27 : f32 to vector<8x32xf32>
    %112 = arith.mulf %111, %110 : vector<8x32xf32>
    %cst_28 = arith.constant 1.000000e+00 : f32
    %113 = vector.broadcast %cst_28 : f32 to vector<8x32xf32>
    %114 = arith.subf %112, %113 : vector<8x32xf32>
    %115 = vector.extract_strided_slice %107 {offsets = [0, 96], sizes = [8, 32], strides = [1, 1]} : vector<8x128xf32> to vector<8x32xf32>
    %116 = arith.mulf %109, %97 : vector<8x32xf32>
    %117 = arith.mulf %108, %114 : vector<8x32xf32>
    %118 = arith.addf %116, %117 : vector<8x32xf32>
    %119 = math.tanh %118 : vector<8x32xf32>
    %120 = arith.mulf %115, %119 : vector<8x32xf32>
    %121 = vector.extract_strided_slice %12 {offsets = [40, 0], sizes = [8, 128], strides = [1, 1]} : vector<64x128xf32> to vector<8x128xf32>
    %cst_29 = arith.constant dense<0.000000e+00> : vector<8x128xf32>
    %122 = tpu.matmul %120, %13, %cst_29 {dimension_numbers = #tpu.dot_dimension_numbers<[1], [0], [0], [1], [0, 0, 1, 1], [], []>} : vector<8x32xf32>, vector<32x128xf32>, vector<8x128xf32> -> vector<8x128xf32>
    %123 = arith.addf %121, %122 : vector<8x128xf32>
    %124 = arith.negf %123 : vector<8x128xf32>
    %125 = math.exp %124 : vector<8x128xf32>
    %cst_30 = arith.constant 1.000000e+00 : f32
    %126 = vector.broadcast %cst_30 : f32 to vector<8x128xf32>
    %127 = arith.addf %126, %125 : vector<8x128xf32>
    %128 = arith.divf %126, %127 : vector<8x128xf32>
    %129 = vector.extract_strided_slice %128 {offsets = [0, 0], sizes = [8, 32], strides = [1, 1]} : vector<8x128xf32> to vector<8x32xf32>
    %130 = vector.extract_strided_slice %128 {offsets = [0, 32], sizes = [8, 32], strides = [1, 1]} : vector<8x128xf32> to vector<8x32xf32>
    %131 = vector.extract_strided_slice %128 {offsets = [0, 64], sizes = [8, 32], strides = [1, 1]} : vector<8x128xf32> to vector<8x32xf32>
    %cst_31 = arith.constant 2.000000e+00 : f32
    %132 = vector.broadcast %cst_31 : f32 to vector<8x32xf32>
    %133 = arith.mulf %132, %131 : vector<8x32xf32>
    %cst_32 = arith.constant 1.000000e+00 : f32
    %134 = vector.broadcast %cst_32 : f32 to vector<8x32xf32>
    %135 = arith.subf %133, %134 : vector<8x32xf32>
    %136 = vector.extract_strided_slice %128 {offsets = [0, 96], sizes = [8, 32], strides = [1, 1]} : vector<8x128xf32> to vector<8x32xf32>
    %137 = arith.mulf %130, %118 : vector<8x32xf32>
    %138 = arith.mulf %129, %135 : vector<8x32xf32>
    %139 = arith.addf %137, %138 : vector<8x32xf32>
    %140 = math.tanh %139 : vector<8x32xf32>
    %141 = arith.mulf %136, %140 : vector<8x32xf32>
    %142 = vector.extract_strided_slice %12 {offsets = [48, 0], sizes = [8, 128], strides = [1, 1]} : vector<64x128xf32> to vector<8x128xf32>
    %cst_33 = arith.constant dense<0.000000e+00> : vector<8x128xf32>
    %143 = tpu.matmul %141, %13, %cst_33 {dimension_numbers = #tpu.dot_dimension_numbers<[1], [0], [0], [1], [0, 0, 1, 1], [], []>} : vector<8x32xf32>, vector<32x128xf32>, vector<8x128xf32> -> vector<8x128xf32>
    %144 = arith.addf %142, %143 : vector<8x128xf32>
    %145 = arith.negf %144 : vector<8x128xf32>
    %146 = math.exp %145 : vector<8x128xf32>
    %cst_34 = arith.constant 1.000000e+00 : f32
    %147 = vector.broadcast %cst_34 : f32 to vector<8x128xf32>
    %148 = arith.addf %147, %146 : vector<8x128xf32>
    %149 = arith.divf %147, %148 : vector<8x128xf32>
    %150 = vector.extract_strided_slice %149 {offsets = [0, 0], sizes = [8, 32], strides = [1, 1]} : vector<8x128xf32> to vector<8x32xf32>
    %151 = vector.extract_strided_slice %149 {offsets = [0, 32], sizes = [8, 32], strides = [1, 1]} : vector<8x128xf32> to vector<8x32xf32>
    %152 = vector.extract_strided_slice %149 {offsets = [0, 64], sizes = [8, 32], strides = [1, 1]} : vector<8x128xf32> to vector<8x32xf32>
    %cst_35 = arith.constant 2.000000e+00 : f32
    %153 = vector.broadcast %cst_35 : f32 to vector<8x32xf32>
    %154 = arith.mulf %153, %152 : vector<8x32xf32>
    %cst_36 = arith.constant 1.000000e+00 : f32
    %155 = vector.broadcast %cst_36 : f32 to vector<8x32xf32>
    %156 = arith.subf %154, %155 : vector<8x32xf32>
    %157 = vector.extract_strided_slice %149 {offsets = [0, 96], sizes = [8, 32], strides = [1, 1]} : vector<8x128xf32> to vector<8x32xf32>
    %158 = arith.mulf %151, %139 : vector<8x32xf32>
    %159 = arith.mulf %150, %156 : vector<8x32xf32>
    %160 = arith.addf %158, %159 : vector<8x32xf32>
    %161 = math.tanh %160 : vector<8x32xf32>
    %162 = arith.mulf %157, %161 : vector<8x32xf32>
    %163 = vector.extract_strided_slice %12 {offsets = [56, 0], sizes = [8, 128], strides = [1, 1]} : vector<64x128xf32> to vector<8x128xf32>
    %cst_37 = arith.constant dense<0.000000e+00> : vector<8x128xf32>
    %164 = tpu.matmul %162, %13, %cst_37 {dimension_numbers = #tpu.dot_dimension_numbers<[1], [0], [0], [1], [0, 0, 1, 1], [], []>} : vector<8x32xf32>, vector<32x128xf32>, vector<8x128xf32> -> vector<8x128xf32>
    %165 = arith.addf %163, %164 : vector<8x128xf32>
    %166 = arith.negf %165 : vector<8x128xf32>
    %167 = math.exp %166 : vector<8x128xf32>
    %cst_38 = arith.constant 1.000000e+00 : f32
    %168 = vector.broadcast %cst_38 : f32 to vector<8x128xf32>
    %169 = arith.addf %168, %167 : vector<8x128xf32>
    %170 = arith.divf %168, %169 : vector<8x128xf32>
    %171 = vector.extract_strided_slice %170 {offsets = [0, 0], sizes = [8, 32], strides = [1, 1]} : vector<8x128xf32> to vector<8x32xf32>
    %172 = vector.extract_strided_slice %170 {offsets = [0, 32], sizes = [8, 32], strides = [1, 1]} : vector<8x128xf32> to vector<8x32xf32>
    %173 = vector.extract_strided_slice %170 {offsets = [0, 64], sizes = [8, 32], strides = [1, 1]} : vector<8x128xf32> to vector<8x32xf32>
    %cst_39 = arith.constant 2.000000e+00 : f32
    %174 = vector.broadcast %cst_39 : f32 to vector<8x32xf32>
    %175 = arith.mulf %174, %173 : vector<8x32xf32>
    %cst_40 = arith.constant 1.000000e+00 : f32
    %176 = vector.broadcast %cst_40 : f32 to vector<8x32xf32>
    %177 = arith.subf %175, %176 : vector<8x32xf32>
    %178 = vector.extract_strided_slice %170 {offsets = [0, 96], sizes = [8, 32], strides = [1, 1]} : vector<8x128xf32> to vector<8x32xf32>
    %179 = arith.mulf %172, %160 : vector<8x32xf32>
    %180 = arith.mulf %171, %177 : vector<8x32xf32>
    %181 = arith.addf %179, %180 : vector<8x32xf32>
    %182 = math.tanh %181 : vector<8x32xf32>
    %183 = arith.mulf %178, %182 : vector<8x32xf32>
    %184 = vector.extract_strided_slice %183 {offsets = [4, 0], sizes = [4, 32], strides = [1, 1]} : vector<8x32xf32> to vector<4x32xf32>
    %185 = vector.extract_strided_slice %183 {offsets = [0, 0], sizes = [4, 32], strides = [1, 1]} : vector<8x32xf32> to vector<4x32xf32>
    %186 = tpu.concatenate %184, %185 in 0 : vector<4x32xf32>, vector<4x32xf32> -> vector<8x32xf32>
    %c200 = arith.constant 200 : index
    %c0_41 = arith.constant 0 : index
    %187 = vector.load %arg1[%c200, %c0_41] : memref<416x128xf32, #tpu.memory_space<vmem>>, vector<32x32xf32>
    %cst_42 = arith.constant dense<0.000000e+00> : vector<8x32xf32>
    %188 = tpu.matmul %183, %187, %cst_42 {dimension_numbers = #tpu.dot_dimension_numbers<[1], [0], [0], [1], [0, 0, 1, 1], [], []>} : vector<8x32xf32>, vector<32x32xf32>, vector<8x32xf32> -> vector<8x32xf32>
    %c232 = arith.constant 232 : index
    %c0_43 = arith.constant 0 : index
    %189 = vector.load %arg1[%c232, %c0_43] : memref<416x128xf32, #tpu.memory_space<vmem>>, vector<32x32xf32>
    %cst_44 = arith.constant dense<0.000000e+00> : vector<8x32xf32>
    %190 = tpu.matmul %186, %189, %cst_44 {dimension_numbers = #tpu.dot_dimension_numbers<[1], [0], [0], [1], [0, 0, 1, 1], [], []>} : vector<8x32xf32>, vector<32x32xf32>, vector<8x32xf32> -> vector<8x32xf32>
    %191 = arith.addf %188, %190 : vector<8x32xf32>
    %192 = arith.subf %183, %186 : vector<8x32xf32>
    %c264 = arith.constant 264 : index
    %c0_45 = arith.constant 0 : index
    %193 = vector.load %arg1[%c264, %c0_45] : memref<416x128xf32, #tpu.memory_space<vmem>>, vector<32x32xf32>
    %cst_46 = arith.constant dense<0.000000e+00> : vector<8x32xf32>
    %194 = tpu.matmul %192, %193, %cst_46 {dimension_numbers = #tpu.dot_dimension_numbers<[1], [0], [0], [1], [0, 0, 1, 1], [], []>} : vector<8x32xf32>, vector<32x32xf32>, vector<8x32xf32> -> vector<8x32xf32>
    %195 = arith.addf %191, %194 : vector<8x32xf32>
    %196 = arith.mulf %183, %186 : vector<8x32xf32>
    %c296 = arith.constant 296 : index
    %c0_47 = arith.constant 0 : index
    %197 = vector.load %arg1[%c296, %c0_47] : memref<416x128xf32, #tpu.memory_space<vmem>>, vector<32x32xf32>
    %cst_48 = arith.constant dense<0.000000e+00> : vector<8x32xf32>
    %198 = tpu.matmul %196, %197, %cst_48 {dimension_numbers = #tpu.dot_dimension_numbers<[1], [0], [0], [1], [0, 0, 1, 1], [], []>} : vector<8x32xf32>, vector<32x32xf32>, vector<8x32xf32> -> vector<8x32xf32>
    %199 = arith.addf %195, %198 : vector<8x32xf32>
    %c328 = arith.constant 328 : index
    %c0_49 = arith.constant 0 : index
    %200 = vector.load %arg1[%c328, %c0_49] : memref<416x128xf32, #tpu.memory_space<vmem>>, vector<1x32xf32>
    %201 = vector.broadcast %200 : vector<1x32xf32> to vector<8x32xf32>
    %202 = arith.addf %199, %201 : vector<8x32xf32>
    %cst_50 = arith.constant 0.000000e+00 : f32
    %203 = vector.broadcast %cst_50 : f32 to vector<8x32xf32>
    %204 = arith.maximumf %202, %203 : vector<8x32xf32>
    %c336 = arith.constant 336 : index
    %c0_51 = arith.constant 0 : index
    %205 = vector.load %arg1[%c336, %c0_51] : memref<416x128xf32, #tpu.memory_space<vmem>>, vector<32x32xf32>
    %cst_52 = arith.constant dense<0.000000e+00> : vector<8x32xf32>
    %206 = tpu.matmul %204, %205, %cst_52 {dimension_numbers = #tpu.dot_dimension_numbers<[1], [0], [0], [1], [0, 0, 1, 1], [], []>} : vector<8x32xf32>, vector<32x32xf32>, vector<8x32xf32> -> vector<8x32xf32>
    %c368 = arith.constant 368 : index
    %c0_53 = arith.constant 0 : index
    %207 = vector.load %arg1[%c368, %c0_53] : memref<416x128xf32, #tpu.memory_space<vmem>>, vector<1x32xf32>
    %208 = vector.broadcast %207 : vector<1x32xf32> to vector<8x32xf32>
    %209 = arith.addf %206, %208 : vector<8x32xf32>
    %cst_54 = arith.constant 0.000000e+00 : f32
    %210 = vector.broadcast %cst_54 : f32 to vector<8x32xf32>
    %211 = arith.maximumf %209, %210 : vector<8x32xf32>
    %c376 = arith.constant 376 : index
    %c0_55 = arith.constant 0 : index
    %212 = vector.load %arg1[%c376, %c0_55] : memref<416x128xf32, #tpu.memory_space<vmem>>, vector<32x128xf32>
    %cst_56 = arith.constant dense<0.000000e+00> : vector<8x128xf32>
    %213 = tpu.matmul %211, %212, %cst_56 {dimension_numbers = #tpu.dot_dimension_numbers<[1], [0], [0], [1], [0, 0, 1, 1], [], []>} : vector<8x32xf32>, vector<32x128xf32>, vector<8x128xf32> -> vector<8x128xf32>
    %c408 = arith.constant 408 : index
    %c0_57 = arith.constant 0 : index
    %214 = vector.load %arg1[%c408, %c0_57] : memref<416x128xf32, #tpu.memory_space<vmem>>, vector<1x128xf32>
    %215 = vector.broadcast %214 : vector<1x128xf32> to vector<8x128xf32>
    %216 = arith.addf %213, %215 : vector<8x128xf32>
    %cst_58 = arith.constant dense<0xFF800000> : vector<8xf32>
    %217 = vector.multi_reduction <maximumf>, %216, %cst_58 [1] : vector<8x128xf32> to vector<8xf32>
    %218 = vector.shape_cast %217 : vector<8xf32> to vector<8x1xf32>
    %219 = vector.broadcast %218 : vector<8x1xf32> to vector<8x128xf32>
    %220 = arith.subf %216, %219 : vector<8x128xf32>
    %221 = math.exp %220 : vector<8x128xf32>
    %cst_59 = arith.constant dense<0.000000e+00> : vector<8xf32>
    %222 = vector.multi_reduction <add>, %221, %cst_59 [1] : vector<8x128xf32> to vector<8xf32>
    %223 = vector.shape_cast %222 : vector<8xf32> to vector<8x1xf32>
    %224 = math.log %223 : vector<8x1xf32>
    %225 = vector.broadcast %224 : vector<8x1xf32> to vector<8x128xf32>
    %226 = arith.subf %220, %225 : vector<8x128xf32>
    %c0_60 = arith.constant 0 : index
    %c0_61 = arith.constant 0 : index
    %227 = vector.load %arg2[%c0_60, %c0_61] : memref<8x128xf32, #tpu.memory_space<vmem>>, vector<8x128xf32>
    tpu.vector_store %arg2[%c0_60, %c0_61], %226 {strides = array<i32>} : memref<8x128xf32, #tpu.memory_space<vmem>>, vector<8x128xf32>,
    return
  }
}

</mosaic_0001>

<llo_original>
// kernel: _lambda_.1
$region0: #{_lambda_.1}
  #allocation0 [shape = 'u32[]', space=smem, size = 0x4, offset = 0x4, fixed_abs, tag = 'smem constant byte address 0x4 - core index']
  #allocation1 [shape = 'u32[72,128]{1,0:T(1,128)}', space=vmem, size = 0x9000, scoped, tag = 'internal scratch']
  %s0 = inlined_call_operand.vmem [shape: s32[64,1], index: 0, kind: input, shape index: {}]
  %s1 = inlined_call_operand.hbm [shape: f32[416,128], index: 1, kind: input, shape index: {}]
  %s2 = inlined_call_operand.vmem [shape: f32[8,128], index: 2, kind: output, shape index: {}]
  %s3 = sld [smem:[#allocation0]]
  $region22: #{_lambda_.1} parent=0
    _
  %s5 = ssub.s32 1, %s3
  %s6 = scalar_select 0, %s5, %s3
  $region1: #{_lambda_.1} parent=0
    #allocation2 [shape = 'u8[212992]{0}', space=vmem, size = 0x34000, scoped, tag = 'input window, operand 1, single buffered']
    #allocation3 [shape = 's32[1]{0}', space=sflag, size = 0x4, scoped, tag = 'scoped memory for _lambda_.1']
    %7 = vsyncpa [#allocation3], 0
    // Predicated region
    $region2: #{_lambda_.1} parent=1 // pred_check
      _
    $region3: #{_lambda_.1} parent=1 // pred_check_branch
      %9 = sbr.rel (0) target = $region5
    $region4: #{_lambda_.1} parent=1 // pred_region
      _
    $region5: #{_lambda_.1} parent=1 // pred_fallthru
      _
    // Predicated region
    $region6: #{_lambda_.1} parent=1 // pred_check
      _
    $region7: #{_lambda_.1} parent=1 // pred_check_branch
      %11 = sbr.rel (0) target = $region9
    $region8: #{_lambda_.1} parent=1 // pred_region
      %13 = vsyncadd [#allocation3], 0
      %s14 = sshll.u32 %s1, 4
      %s15 = int_to_ptr.hbm [resolvable:$true] %s14
      %s16 = sshll.u32 [#allocation2], 4
      %s17 = int_to_ptr.vmem [resolvable:$true] %s16
      %22 = dma.hbm_to_vmem [thread:$0]  %s15, 6656, %s17, [#allocation3], 128, 128, 8
    $region9: #{_lambda_.1} parent=1 // pred_fallthru
      _
    // Predicated region
    $region10: #{_lambda_.1} parent=1 // pred_check
      _
    $region11: #{_lambda_.1} parent=1 // pred_check_branch
      %24 = sbr.rel (0) target = $region13
    $region12: #{_lambda_.1} parent=1 // pred_region
      %26 = dma.done [#allocation3], 6656
    $region13: #{_lambda_.1} parent=1 // pred_fallthru
      _
    %v27 = vld [vmem:[%s0] sm:$0xff]
    %v28 = vld [vmem:[%s0 + $0x8] sm:$0xff]
    %v29 = vld [vmem:[%s0 + $0x10] sm:$0xff]
    %v30 = vld [vmem:[%s0 + $0x18] sm:$0xff]
    %v31 = vld [vmem:[%s0 + $0x20] sm:$0xff]
    %v32 = vld [vmem:[%s0 + $0x28] sm:$0xff]
    %v33 = vld [vmem:[%s0 + $0x30] sm:$0xff]
    %v34 = vld [vmem:[%s0 + $0x38] sm:$0xff]
    %v35 = vlaneseq
    %v36 = vand.u32 %v35, 127
    %37 = vset.pattern.permute.xlu0 0
    %38 = vperm.xlu0 %37, %v27
    %v39 = vpop.permute.xlu0 %38
    %40 = vset.pattern.permute.xlu0 0
    %41 = vperm.xlu0 %40, %v28
    %v42 = vpop.permute.xlu0 %41
    %43 = vset.pattern.permute.xlu0 0
    %44 = vperm.xlu0 %43, %v29
    %v45 = vpop.permute.xlu0 %44
    %46 = vset.pattern.permute.xlu0 0
    %47 = vperm.xlu0 %46, %v30
    %v48 = vpop.permute.xlu0 %47
    %49 = vset.pattern.permute.xlu0 0
    %50 = vperm.xlu0 %49, %v31
    %v51 = vpop.permute.xlu0 %50
    %52 = vset.pattern.permute.xlu0 0
    %53 = vperm.xlu0 %52, %v32
    %v54 = vpop.permute.xlu0 %53
    %55 = vset.pattern.permute.xlu0 0
    %56 = vperm.xlu0 %55, %v33
    %v57 = vpop.permute.xlu0 %56
    %58 = vset.pattern.permute.xlu0 0
    %59 = vperm.xlu0 %58, %v34
    %v60 = vpop.permute.xlu0 %59
    %vm61 = vcmp.eq.s32.totalorder %v39, %v36
    %vm62 = vcmp.eq.s32.totalorder %v42, %v36
    %vm63 = vcmp.eq.s32.totalorder %v45, %v36
    %vm64 = vcmp.eq.s32.totalorder %v48, %v36
    %vm65 = vcmp.eq.s32.totalorder %v51, %v36
    %vm66 = vcmp.eq.s32.totalorder %v54, %v36
    %vm67 = vcmp.eq.s32.totalorder %v57, %v36
    %vm68 = vcmp.eq.s32.totalorder %v60, %v36
    %v69 = vsel %vm61, 1, 0
    %v70 = vsel %vm62, 1, 0
    %v71 = vsel %vm63, 1, 0
    %v72 = vsel %vm64, 1, 0
    %v73 = vsel %vm65, 1, 0
    %v74 = vsel %vm66, 1, 0
    %v75 = vsel %vm67, 1, 0
    %v76 = vsel %vm68, 1, 0
    %v77 = vcvt.s32.f32 %v69
    %v78 = vcvt.s32.f32 %v70
    %v79 = vcvt.s32.f32 %v71
    %v80 = vcvt.s32.f32 %v72
    %v81 = vcvt.s32.f32 %v73
    %v82 = vcvt.s32.f32 %v74
    %v83 = vcvt.s32.f32 %v75
    %v84 = vcvt.s32.f32 %v76
    %v85 = vld [vmem:[#allocation2] sm:$0xff]
    %v86 = vld [vmem:[#allocation2 + $0x8] sm:$0xff]
    %v87 = vld [vmem:[#allocation2 + $0x10] sm:$0xff]
    %v88 = vld [vmem:[#allocation2 + $0x18] sm:$0xff]
    %v89 = vld [vmem:[#allocation2 + $0x20] sm:$0xff]
    %v90 = vld [vmem:[#allocation2 + $0x28] sm:$0xff]
    %v91 = vld [vmem:[#allocation2 + $0x30] sm:$0xff]
    %v92 = vld [vmem:[#allocation2 + $0x38] sm:$0xff]
    %v93 = vld [vmem:[#allocation2 + $0x40] sm:$0xff]
    %v94 = vld [vmem:[#allocation2 + $0x48] sm:$0xff]
    %v95 = vld [vmem:[#allocation2 + $0x50] sm:$0xff]
    %v96 = vld [vmem:[#allocation2 + $0x58] sm:$0xff]
    %v97 = vld [vmem:[#allocation2 + $0x60] sm:$0xff]
    %v98 = vld [vmem:[#allocation2 + $0x68] sm:$0xff]
    %v99 = vld [vmem:[#allocation2 + $0x70] sm:$0xff]
    %v100 = vld [vmem:[#allocation2 + $0x78] sm:$0xff]
    %101 = vmatpush.msra.mxu0 %v100
    %102 = vmatpush.msra.mxu0 %v99
    %103 = vmatpush.msra.mxu0 %v98
    %104 = vmatpush.msra.mxu0 %v97
    %105 = vmatpush.msra.mxu0 %v96
    %106 = vmatpush.msra.mxu0 %v95
    %107 = vmatpush.msra.mxu0 %v94
    %108 = vmatpush.msra.mxu0 %v93
    %109 = vmatpush.msra.mxu0 %v92
    %110 = vmatpush.msra.mxu0 %v91
    %111 = vmatpush.msra.mxu0 %v90
    %112 = vmatpush.msra.mxu0 %v89
    %113 = vmatpush.msra.mxu0 %v88
    %114 = vmatpush.msra.mxu0 %v87
    %115 = vmatpush.msra.mxu0 %v86
    %116 = vmatpush.msra.mxu0 %v85
    %117 = vmatmul.f32.gmra.mxu0 %v77
    %v118 = vpop.f32.mrf.mxu0
    %v119 = vadd.f32 0.0, %v118
    %120 = vmatmul.f32.gmra.mxu0 %v78
    %v121 = vpop.f32.mrf.mxu0
    %v122 = vadd.f32 0.0, %v121
    %123 = vmatmul.f32.gmra.mxu0 %v79
    %v124 = vpop.f32.mrf.mxu0
    %v125 = vadd.f32 0.0, %v124
    %126 = vmatmul.f32.gmra.mxu0 %v80
    %v127 = vpop.f32.mrf.mxu0
    %v128 = vadd.f32 0.0, %v127
    %129 = vmatmul.f32.gmra.mxu0 %v81
    %v130 = vpop.f32.mrf.mxu0
    %v131 = vadd.f32 0.0, %v130
    %132 = vmatmul.f32.gmra.mxu0 %v82
    %v133 = vpop.f32.mrf.mxu0
    %v134 = vadd.f32 0.0, %v133
    %135 = vmatmul.f32.gmra.mxu0 %v83
    %v136 = vpop.f32.mrf.mxu0
    %v137 = vadd.f32 0.0, %v136
    %138 = vmatmul.f32.gmra.mxu0 %v84
    %v139 = vpop.f32.mrf.mxu0
    %v140 = vadd.f32 0.0, %v139
    %141 = vdwg.mxu0
    %v142 = vld [vmem:[#allocation2 + $0x80] sm:$0xff]
    %v143 = vld [vmem:[#allocation2 + $0x88] sm:$0xff]
    %v144 = vld [vmem:[#allocation2 + $0x90] sm:$0xff]
    %v145 = vld [vmem:[#allocation2 + $0x98] sm:$0xff]
    %v146 = vld [vmem:[#allocation2 + $0xa0] sm:$0x1]
    %v147 = vperm.slane %v146, 0
    %vm148 = vcmask 261120
    %v150 = vsel %vm148, %v119, 0
    %v153 = vsel %vm148, %v122, 0
    %v156 = vsel %vm148, %v125, 0
    %v159 = vsel %vm148, %v128, 0
    %v162 = vsel %vm148, %v131, 0
    %v165 = vsel %vm148, %v134, 0
    %v168 = vsel %vm148, %v137, 0
    %v171 = vsel %vm148, %v140, 0
    %173 = vmatpush.msra.mxu0 0.0
    %174 = vmatpush.msra.mxu0 0.0
    %175 = vmatpush.msra.mxu0 0.0
    %176 = vmatpush.msra.mxu0 0.0
    %177 = vmatpush.msra.mxu0 0.0
    %178 = vmatpush.msra.mxu0 0.0
    %179 = vmatpush.msra.mxu0 0.0
    %180 = vmatpush.msra.mxu0 0.0
    %181 = vmatpush.msra.mxu0 0.0
    %182 = vmatpush.msra.mxu0 0.0
    %183 = vmatpush.msra.mxu0 0.0
    %184 = vmatpush.msra.mxu0 0.0
    %185 = vmatpush.msra.mxu0 %v145
    %186 = vmatpush.msra.mxu0 %v144
    %187 = vmatpush.msra.mxu0 %v143
    %188 = vmatpush.msra.mxu0 %v142
    %189 = vmatmul.f32.gmra.mxu0 %v150
    %v190 = vpop.f32.mrf.mxu0
    %v191 = vadd.f32 %v147, %v190
    %192 = vmatmul.f32.gmra.mxu0 %v153
    %v193 = vpop.f32.mrf.mxu0
    %v194 = vadd.f32 %v147, %v193
    %195 = vmatmul.f32.gmra.mxu0 %v156
    %v196 = vpop.f32.mrf.mxu0
    %v197 = vadd.f32 %v147, %v196
    %198 = vmatmul.f32.gmra.mxu0 %v159
    %v199 = vpop.f32.mrf.mxu0
    %v200 = vadd.f32 %v147, %v199
    %201 = vmatmul.f32.gmra.mxu0 %v162
    %v202 = vpop.f32.mrf.mxu0
    %v203 = vadd.f32 %v147, %v202
    %204 = vmatmul.f32.gmra.mxu0 %v165
    %v205 = vpop.f32.mrf.mxu0
    %v206 = vadd.f32 %v147, %v205
    %207 = vmatmul.f32.gmra.mxu0 %v168
    %v208 = vpop.f32.mrf.mxu0
    %v209 = vadd.f32 %v147, %v208
    %210 = vmatmul.f32.gmra.mxu0 %v171
    %v211 = vpop.f32.mrf.mxu0
    %v212 = vadd.f32 %v147, %v211
    %213 = vdwg.mxu0
    %v214 = vld [vmem:[#allocation2 + $0xa8] sm:$0xff]
    %v215 = vld [vmem:[#allocation2 + $0xb0] sm:$0xff]
    %v216 = vld [vmem:[#allocation2 + $0xb8] sm:$0xff]
    %v217 = vld [vmem:[#allocation2 + $0xc0] sm:$0xff]
    %v219 = vsel %vm148, 0.0, 0
    %221 = vmatpush.msra.mxu0 0.0
    %222 = vmatpush.msra.mxu0 0.0
    %223 = vmatpush.msra.mxu0 0.0
    %224 = vmatpush.msra.mxu0 0.0
    %225 = vmatpush.msra.mxu0 0.0
    %226 = vmatpush.msra.mxu0 0.0
    %227 = vmatpush.msra.mxu0 0.0
    %228 = vmatpush.msra.mxu0 0.0
    %229 = vmatpush.msra.mxu0 0.0
    %230 = vmatpush.msra.mxu0 0.0
    %231 = vmatpush.msra.mxu0 0.0
    %232 = vmatpush.msra.mxu0 0.0
    %233 = vmatpush.msra.mxu0 %v217
    %234 = vmatpush.msra.mxu0 %v216
    %235 = vmatpush.msra.mxu0 %v215
    %236 = vmatpush.msra.mxu0 %v214
    %237 = vmatmul.f32.gmra.mxu0 %v219
    %v238 = vpop.f32.mrf.mxu0
    %v239 = vadd.f32 0.0, %v238
    %240 = vdwg.mxu0
    %v241 = vadd.f32 %v191, %v239
    %v242 = vxor.u32 %v241, 2147483648
    %v243 = vmul.f32 %v242, 1.442695
    %v244 = vpow.pop %v243
    %v245 = vadd.f32 %v244, 1.0
    %v246 = vrcp.pop %v245
    %v247 = vmul.f32 %v245, %v246
    %v248 = vsub.f32 1.0, %v247
    %v249 = vmul.f32 %v246, %v248
    %v250 = vadd.f32 %v246, %v249
    %vm251 = vweird.f32 %v245
    %vm252 = vweird.f32 %v246
    %vm253 = vmor %vm251, %vm252
    %v254 = vsel %vm253, %v246, %v250
    %v255 = vand.u32 2147483647, %v245
    %vm256 = vcmp.eq.f32.partialorder %v255, 8.507059e+37
    %v257 = vand.u32 %v245, 2147483648
    %v258 = vor.u32 1.1754944e-38, %v257
    %v259 = vsel %vm256, %v258, %v254
    %v260 = vmul.f32 1.0, %v259
    %v261 = vmul.f32 %v260, 2.0
    %v262 = vsub.f32 %v261, 1.0
    %v263 = vmul.f32 %v260, 0.0
    %265 = vrot.lane.b32.xlu0 %v262, 64
    %v266 = vpop.permute.xlu0 %265
    %v268 = vmul.f32 %v260, %v266
    %270 = vrot.lane.b32.xlu0 %v268, 32
    %v271 = vpop.permute.xlu0 %270
    %v273 = vadd.f32 %v263, %v271
    %v274 = vtanh.pop %v273
    %276 = vrot.lane.b32.xlu0 %v274, 64
    %v277 = vpop.permute.xlu0 %276
    %v279 = vmul.f32 %v260, %v277
    %281 = vrot.lane.b32.xlu0 %v279, 32
    %v282 = vpop.permute.xlu0 %281
    %v283 = vsel %vm148, %v282, 0
    %285 = vmatpush.msra.mxu0 0.0
    %286 = vmatpush.msra.mxu0 0.0
    %287 = vmatpush.msra.mxu0 0.0
    %288 = vmatpush.msra.mxu0 0.0
    %289 = vmatpush.msra.mxu0 0.0
    %290 = vmatpush.msra.mxu0 0.0
    %291 = vmatpush.msra.mxu0 0.0
    %292 = vmatpush.msra.mxu0 0.0
    %293 = vmatpush.msra.mxu0 0.0
    %294 = vmatpush.msra.mxu0 0.0
    %295 = vmatpush.msra.mxu0 0.0
    %296 = vmatpush.msra.mxu0 0.0
    %297 = vmatpush.msra.mxu0 %v217
    %298 = vmatpush.msra.mxu0 %v216
    %299 = vmatpush.msra.mxu0 %v215
    %300 = vmatpush.msra.mxu0 %v214
    %301 = vmatmul.f32.gmra.mxu0 %v283
    %v302 = vpop.f32.mrf.mxu0
    %v303 = vadd.f32 0.0, %v302
    %304 = vdwg.mxu0
    %v305 = vadd.f32 %v194, %v303
    %v306 = vxor.u32 %v305, 2147483648
    %v307 = vmul.f32 %v306, 1.442695
    %v308 = vpow.pop %v307
    %v309 = vadd.f32 %v308, 1.0
    %v310 = vrcp.pop %v309
    %v311 = vmul.f32 %v309, %v310
    %v312 = vsub.f32 1.0, %v311
    %v313 = vmul.f32 %v310, %v312
    %v314 = vadd.f32 %v310, %v313
    %vm315 = vweird.f32 %v309
    %vm316 = vweird.f32 %v310
    %vm317 = vmor %vm315, %vm316
    %v318 = vsel %vm317, %v310, %v314
    %v319 = vand.u32 2147483647, %v309
    %vm320 = vcmp.eq.f32.partialorder %v319, 8.507059e+37
    %v321 = vand.u32 %v309, 2147483648
    %v322 = vor.u32 1.1754944e-38, %v321
    %v323 = vsel %vm320, %v322, %v318
    %v324 = vmul.f32 1.0, %v323
    %v325 = vmul.f32 %v324, 2.0
    %v326 = vsub.f32 %v325, 1.0
    %v327 = vmul.f32 %v324, %v273
    %329 = vrot.lane.b32.xlu0 %v326, 64
    %v330 = vpop.permute.xlu0 %329
    %v332 = vmul.f32 %v324, %v330
    %334 = vrot.lane.b32.xlu0 %v332, 32
    %v335 = vpop.permute.xlu0 %334
    %v337 = vadd.f32 %v327, %v335
    %v338 = vtanh.pop %v337
    %340 = vrot.lane.b32.xlu0 %v338, 64
    %v341 = vpop.permute.xlu0 %340
    %v343 = vmul.f32 %v324, %v341
    %345 = vrot.lane.b32.xlu0 %v343, 32
    %v346 = vpop.permute.xlu0 %345
    %v347 = vsel %vm148, %v346, 0
    %349 = vmatpush.msra.mxu0 0.0
    %350 = vmatpush.msra.mxu0 0.0
    %351 = vmatpush.msra.mxu0 0.0
    %352 = vmatpush.msra.mxu0 0.0
    %353 = vmatpush.msra.mxu0 0.0
    %354 = vmatpush.msra.mxu0 0.0
    %355 = vmatpush.msra.mxu0 0.0
    %356 = vmatpush.msra.mxu0 0.0
    %357 = vmatpush.msra.mxu0 0.0
    %358 = vmatpush.msra.mxu0 0.0
    %359 = vmatpush.msra.mxu0 0.0
    %360 = vmatpush.msra.mxu0 0.0
    %361 = vmatpush.msra.mxu0 %v217
    %362 = vmatpush.msra.mxu0 %v216
    %363 = vmatpush.msra.mxu0 %v215
    %364 = vmatpush.msra.mxu0 %v214
    %365 = vmatmul.f32.gmra.mxu0 %v347
    %v366 = vpop.f32.mrf.mxu0
    %v367 = vadd.f32 0.0, %v366
    %368 = vdwg.mxu0
    %v369 = vadd.f32 %v197, %v367
    %v370 = vxor.u32 %v369, 2147483648
    %v371 = vmul.f32 %v370, 1.442695
    %v372 = vpow.pop %v371
    %v373 = vadd.f32 %v372, 1.0
    %v374 = vrcp.pop %v373
    %v375 = vmul.f32 %v373, %v374
    %v376 = vsub.f32 1.0, %v375
    %v377 = vmul.f32 %v374, %v376
    %v378 = vadd.f32 %v374, %v377
    %vm379 = vweird.f32 %v373
    %vm380 = vweird.f32 %v374
    %vm381 = vmor %vm379, %vm380
    %v382 = vsel %vm381, %v374, %v378
    %v383 = vand.u32 2147483647, %v373
    %vm384 = vcmp.eq.f32.partialorder %v383, 8.507059e+37
    %v385 = vand.u32 %v373, 2147483648
    %v386 = vor.u32 1.1754944e-38, %v385
    %v387 = vsel %vm384, %v386, %v382
    %v388 = vmul.f32 1.0, %v387
    %v389 = vmul.f32 %v388, 2.0
    %v390 = vsub.f32 %v389, 1.0
    %v391 = vmul.f32 %v388, %v337
    %393 = vrot.lane.b32.xlu0 %v390, 64
    %v394 = vpop.permute.xlu0 %393
    %v396 = vmul.f32 %v388, %v394
    %398 = vrot.lane.b32.xlu0 %v396, 32
    %v399 = vpop.permute.xlu0 %398
    %v401 = vadd.f32 %v391, %v399
    %v402 = vtanh.pop %v401
    %404 = vrot.lane.b32.xlu0 %v402, 64
    %v405 = vpop.permute.xlu0 %404
    %v407 = vmul.f32 %v388, %v405
    %409 = vrot.lane.b32.xlu0 %v407, 32
    %v410 = vpop.permute.xlu0 %409
    %v411 = vsel %vm148, %v410, 0
    %413 = vmatpush.msra.mxu0 0.0
    %414 = vmatpush.msra.mxu0 0.0
    %415 = vmatpush.msra.mxu0 0.0
    %416 = vmatpush.msra.mxu0 0.0
    %417 = vmatpush.msra.mxu0 0.0
    %418 = vmatpush.msra.mxu0 0.0
    %419 = vmatpush.msra.mxu0 0.0
    %420 = vmatpush.msra.mxu0 0.0
    %421 = vmatpush.msra.mxu0 0.0
    %422 = vmatpush.msra.mxu0 0.0
    %423 = vmatpush.msra.mxu0 0.0
    %424 = vmatpush.msra.mxu0 0.0
    %425 = vmatpush.msra.mxu0 %v217
    %426 = vmatpush.msra.mxu0 %v216
    %427 = vmatpush.msra.mxu0 %v215
    %428 = vmatpush.msra.mxu0 %v214
    %429 = vmatmul.f32.gmra.mxu0 %v411
    %v430 = vpop.f32.mrf.mxu0
    %v431 = vadd.f32 0.0, %v430
    %432 = vdwg.mxu0
    %v433 = vadd.f32 %v200, %v431
    %v434 = vxor.u32 %v433, 2147483648
    %v435 = vmul.f32 %v434, 1.442695
    %v436 = vpow.pop %v435
    %v437 = vadd.f32 %v436, 1.0
    %v438 = vrcp.pop %v437
    %v439 = vmul.f32 %v437, %v438
    %v440 = vsub.f32 1.0, %v439
    %v441 = vmul.f32 %v438, %v440
    %v442 = vadd.f32 %v438, %v441
    %vm443 = vweird.f32 %v437
    %vm444 = vweird.f32 %v438
    %vm445 = vmor %vm443, %vm444
    %v446 = vsel %vm445, %v438, %v442
    %v447 = vand.u32 2147483647, %v437
    %vm448 = vcmp.eq.f32.partialorder %v447, 8.507059e+37
    %v449 = vand.u32 %v437, 2147483648
    %v450 = vor.u32 1.1754944e-38, %v449
    %v451 = vsel %vm448, %v450, %v446
    %v452 = vmul.f32 1.0, %v451
    %v453 = vmul.f32 %v452, 2.0
    %v454 = vsub.f32 %v453, 1.0
    %v455 = vmul.f32 %v452, %v401
    %457 = vrot.lane.b32.xlu0 %v454, 64
    %v458 = vpop.permute.xlu0 %457
    %v460 = vmul.f32 %v452, %v458
    %462 = vrot.lane.b32.xlu0 %v460, 32
    %v463 = vpop.permute.xlu0 %462
    %v465 = vadd.f32 %v455, %v463
    %v466 = vtanh.pop %v465
    %468 = vrot.lane.b32.xlu0 %v466, 64
    %v469 = vpop.permute.xlu0 %468
    %v471 = vmul.f32 %v452, %v469
    %473 = vrot.lane.b32.xlu0 %v471, 32
    %v474 = vpop.permute.xlu0 %473
    %v475 = vsel %vm148, %v474, 0
    %477 = vmatpush.msra.mxu0 0.0
    %478 = vmatpush.msra.mxu0 0.0
    %479 = vmatpush.msra.mxu0 0.0
    %480 = vmatpush.msra.mxu0 0.0
    %481 = vmatpush.msra.mxu0 0.0
    %482 = vmatpush.msra.mxu0 0.0
    %483 = vmatpush.msra.mxu0 0.0
    %484 = vmatpush.msra.mxu0 0.0
    %485 = vmatpush.msra.mxu0 0.0
    %486 = vmatpush.msra.mxu0 0.0
    %487 = vmatpush.msra.mxu0 0.0
    %488 = vmatpush.msra.mxu0 0.0
    %489 = vmatpush.msra.mxu0 %v217
    %490 = vmatpush.msra.mxu0 %v216
    %491 = vmatpush.msra.mxu0 %v215
    %492 = vmatpush.msra.mxu0 %v214
    %493 = vmatmul.f32.gmra.mxu0 %v475
    %v494 = vpop.f32.mrf.mxu0
    %v495 = vadd.f32 0.0, %v494
    %496 = vdwg.mxu0
    %v497 = vadd.f32 %v203, %v495
    %v498 = vxor.u32 %v497, 2147483648
    %v499 = vmul.f32 %v498, 1.442695
    %v500 = vpow.pop %v499
    %v501 = vadd.f32 %v500, 1.0
    %v502 = vrcp.pop %v501
    %v503 = vmul.f32 %v501, %v502
    %v504 = vsub.f32 1.0, %v503
    %v505 = vmul.f32 %v502, %v504
    %v506 = vadd.f32 %v502, %v505
    %vm507 = vweird.f32 %v501
    %vm508 = vweird.f32 %v502
    %vm509 = vmor %vm507, %vm508
    %v510 = vsel %vm509, %v502, %v506
    %v511 = vand.u32 2147483647, %v501
    %vm512 = vcmp.eq.f32.partialorder %v511, 8.507059e+37
    %v513 = vand.u32 %v501, 2147483648
    %v514 = vor.u32 1.1754944e-38, %v513
    %v515 = vsel %vm512, %v514, %v510
    %v516 = vmul.f32 1.0, %v515
    %v517 = vmul.f32 %v516, 2.0
    %v518 = vsub.f32 %v517, 1.0
    %v519 = vmul.f32 %v516, %v465
    %521 = vrot.lane.b32.xlu0 %v518, 64
    %v522 = vpop.permute.xlu0 %521
    %v524 = vmul.f32 %v516, %v522
    %526 = vrot.lane.b32.xlu0 %v524, 32
    %v527 = vpop.permute.xlu0 %526
    %v529 = vadd.f32 %v519, %v527
    %v530 = vtanh.pop %v529
    %532 = vrot.lane.b32.xlu0 %v530, 64
    %v533 = vpop.permute.xlu0 %532
    %v535 = vmul.f32 %v516, %v533
    %537 = vrot.lane.b32.xlu0 %v535, 32
    %v538 = vpop.permute.xlu0 %537
    %v539 = vsel %vm148, %v538, 0
    %541 = vmatpush.msra.mxu0 0.0
    %542 = vmatpush.msra.mxu0 0.0
    %543 = vmatpush.msra.mxu0 0.0
    %544 = vmatpush.msra.mxu0 0.0
    %545 = vmatpush.msra.mxu0 0.0
    %546 = vmatpush.msra.mxu0 0.0
    %547 = vmatpush.msra.mxu0 0.0
    %548 = vmatpush.msra.mxu0 0.0
    %549 = vmatpush.msra.mxu0 0.0
    %550 = vmatpush.msra.mxu0 0.0
    %551 = vmatpush.msra.mxu0 0.0
    %552 = vmatpush.msra.mxu0 0.0
    %553 = vmatpush.msra.mxu0 %v217
    %554 = vmatpush.msra.mxu0 %v216
    %555 = vmatpush.msra.mxu0 %v215
    %556 = vmatpush.msra.mxu0 %v214
    %557 = vmatmul.f32.gmra.mxu0 %v539
    %v558 = vpop.f32.mrf.mxu0
    %v559 = vadd.f32 0.0, %v558
    %560 = vdwg.mxu0
    %v561 = vadd.f32 %v206, %v559
    %v562 = vxor.u32 %v561, 2147483648
    %v563 = vmul.f32 %v562, 1.442695
    %v564 = vpow.pop %v563
    %v565 = vadd.f32 %v564, 1.0
    %v566 = vrcp.pop %v565
    %v567 = vmul.f32 %v565, %v566
    %v568 = vsub.f32 1.0, %v567
    %v569 = vmul.f32 %v566, %v568
    %v570 = vadd.f32 %v566, %v569
    %vm571 = vweird.f32 %v565
    %vm572 = vweird.f32 %v566
    %vm573 = vmor %vm571, %vm572
    %v574 = vsel %vm573, %v566, %v570
    %v575 = vand.u32 2147483647, %v565
    %vm576 = vcmp.eq.f32.partialorder %v575, 8.507059e+37
    %v577 = vand.u32 %v565, 2147483648
    %v578 = vor.u32 1.1754944e-38, %v577
    %v579 = vsel %vm576, %v578, %v574
    %v580 = vmul.f32 1.0, %v579
    %v581 = vmul.f32 %v580, 2.0
    %v582 = vsub.f32 %v581, 1.0
    %v583 = vmul.f32 %v580, %v529
    %585 = vrot.lane.b32.xlu0 %v582, 64
    %v586 = vpop.permute.xlu0 %585
    %v588 = vmul.f32 %v580, %v586
    %590 = vrot.lane.b32.xlu0 %v588, 32
    %v591 = vpop.permute.xlu0 %590
    %v593 = vadd.f32 %v583, %v591
    %v594 = vtanh.pop %v593
    %596 = vrot.lane.b32.xlu0 %v594, 64
    %v597 = vpop.permute.xlu0 %596
    %v599 = vmul.f32 %v580, %v597
    %601 = vrot.lane.b32.xlu0 %v599, 32
    %v602 = vpop.permute.xlu0 %601
    %v603 = vsel %vm148, %v602, 0
    %605 = vmatpush.msra.mxu0 0.0
    %606 = vmatpush.msra.mxu0 0.0
    %607 = vmatpush.msra.mxu0 0.0
    %608 = vmatpush.msra.mxu0 0.0
    %609 = vmatpush.msra.mxu0 0.0
    %610 = vmatpush.msra.mxu0 0.0
    %611 = vmatpush.msra.mxu0 0.0
    %612 = vmatpush.msra.mxu0 0.0
    %613 = vmatpush.msra.mxu0 0.0
    %614 = vmatpush.msra.mxu0 0.0
    %615 = vmatpush.msra.mxu0 0.0
    %616 = vmatpush.msra.mxu0 0.0
    %617 = vmatpush.msra.mxu0 %v217
    %618 = vmatpush.msra.mxu0 %v216
    %619 = vmatpush.msra.mxu0 %v215
    %620 = vmatpush.msra.mxu0 %v214
    %621 = vmatmul.f32.gmra.mxu0 %v603
    %v622 = vpop.f32.mrf.mxu0
    %v623 = vadd.f32 0.0, %v622
    %624 = vdwg.mxu0
    %v625 = vadd.f32 %v209, %v623
    %v626 = vxor.u32 %v625, 2147483648
    %v627 = vmul.f32 %v626, 1.442695
    %v628 = vpow.pop %v627
    %v629 = vadd.f32 %v628, 1.0
    %v630 = vrcp.pop %v629
    %v631 = vmul.f32 %v629, %v630
    %v632 = vsub.f32 1.0, %v631
    %v633 = vmul.f32 %v630, %v632
    %v634 = vadd.f32 %v630, %v633
    %vm635 = vweird.f32 %v629
    %vm636 = vweird.f32 %v630
    %vm637 = vmor %vm635, %vm636
    %v638 = vsel %vm637, %v630, %v634
    %v639 = vand.u32 2147483647, %v629
    %vm640 = vcmp.eq.f32.partialorder %v639, 8.507059e+37
    %v641 = vand.u32 %v629, 2147483648
    %v642 = vor.u32 1.1754944e-38, %v641
    %v643 = vsel %vm640, %v642, %v638
    %v644 = vmul.f32 1.0, %v643
    %v645 = vmul.f32 %v644, 2.0
    %v646 = vsub.f32 %v645, 1.0
    %v647 = vmul.f32 %v644, %v593
    %649 = vrot.lane.b32.xlu0 %v646, 64
    %v650 = vpop.permute.xlu0 %649
    %v652 = vmul.f32 %v644, %v650
    %654 = vrot.lane.b32.xlu0 %v652, 32
    %v655 = vpop.permute.xlu0 %654
    %v657 = vadd.f32 %v647, %v655
    %v658 = vtanh.pop %v657
    %660 = vrot.lane.b32.xlu0 %v658, 64
    %v661 = vpop.permute.xlu0 %660
    %v663 = vmul.f32 %v644, %v661
    %665 = vrot.lane.b32.xlu0 %v663, 32
    %v666 = vpop.permute.xlu0 %665
    %v667 = vsel %vm148, %v666, 0
    %669 = vmatpush.msra.mxu0 0.0
    %670 = vmatpush.msra.mxu0 0.0
    %671 = vmatpush.msra.mxu0 0.0
    %672 = vmatpush.msra.mxu0 0.0
    %673 = vmatpush.msra.mxu0 0.0
    %674 = vmatpush.msra.mxu0 0.0
    %675 = vmatpush.msra.mxu0 0.0
    %676 = vmatpush.msra.mxu0 0.0
    %677 = vmatpush.msra.mxu0 0.0
    %678 = vmatpush.msra.mxu0 0.0
    %679 = vmatpush.msra.mxu0 0.0
    %680 = vmatpush.msra.mxu0 0.0
    %681 = vmatpush.msra.mxu0 %v217
    %682 = vmatpush.msra.mxu0 %v216
    %683 = vmatpush.msra.mxu0 %v215
    %684 = vmatpush.msra.mxu0 %v214
    %685 = vmatmul.f32.gmra.mxu0 %v667
    %v686 = vpop.f32.mrf.mxu0
    %v687 = vadd.f32 0.0, %v686
    %688 = vdwg.mxu0
    %v689 = vadd.f32 %v212, %v687
    %v690 = vxor.u32 %v689, 2147483648
    %v691 = vmul.f32 %v690, 1.442695
    %v692 = vpow.pop %v691
    %v693 = vadd.f32 %v692, 1.0
    %v694 = vrcp.pop %v693
    %v695 = vmul.f32 %v693, %v694
    %v696 = vsub.f32 1.0, %v695
    %v697 = vmul.f32 %v694, %v696
    %v698 = vadd.f32 %v694, %v697
    %vm699 = vweird.f32 %v693
    %vm700 = vweird.f32 %v694
    %vm701 = vmor %vm699, %vm700
    %v702 = vsel %vm701, %v694, %v698
    %v703 = vand.u32 2147483647, %v693
    %vm704 = vcmp.eq.f32.partialorder %v703, 8.507059e+37
    %v705 = vand.u32 %v693, 2147483648
    %v706 = vor.u32 1.1754944e-38, %v705
    %v707 = vsel %vm704, %v706, %v702
    %v708 = vmul.f32 1.0, %v707
    %v709 = vmul.f32 %v708, 2.0
    %v710 = vsub.f32 %v709, 1.0
    %v711 = vmul.f32 %v708, %v657
    %713 = vrot.lane.b32.xlu0 %v710, 64
    %v714 = vpop.permute.xlu0 %713
    %v716 = vmul.f32 %v708, %v714
    %718 = vrot.lane.b32.xlu0 %v716, 32
    %v719 = vpop.permute.xlu0 %718
    %v721 = vadd.f32 %v711, %v719
    %v722 = vtanh.pop %v721
    %724 = vrot.lane.b32.xlu0 %v722, 64
    %v725 = vpop.permute.xlu0 %724
    %v727 = vmul.f32 %v708, %v725
    %v729 = vrot.slane %v727, 4
    %vm731 = vcmask 1043456
    %v732 = vsel %vm731, %v729, %v729
    %v733 = vld [vmem:[#allocation2 + $0xc8] sm:$0xff]
    %v734 = vld [vmem:[#allocation2 + $0xd0] sm:$0xff]
    %v735 = vld [vmem:[#allocation2 + $0xd8] sm:$0xff]
    %v736 = vld [vmem:[#allocation2 + $0xe0] sm:$0xff]
    %v737 = vld [vmem:[#allocation2 + $0xe8] sm:$0xff]
    %v738 = vld [vmem:[#allocation2 + $0xf0] sm:$0xff]
    %v739 = vld [vmem:[#allocation2 + $0xf8] sm:$0xff]
    %v740 = vld [vmem:[#allocation2 + $0x100] sm:$0xff]
    %742 = vrot.lane.b32.xlu0 %v732, 32
    %v743 = vpop.permute.xlu0 %742
    %v744 = vsel %vm148, %v743, 0
    %746 = vmatpush.msra.mxu0 0.0
    %747 = vmatpush.msra.mxu0 0.0
    %748 = vmatpush.msra.mxu0 0.0
    %749 = vmatpush.msra.mxu0 0.0
    %750 = vmatpush.msra.mxu0 0.0
    %751 = vmatpush.msra.mxu0 0.0
    %752 = vmatpush.msra.mxu0 0.0
    %753 = vmatpush.msra.mxu0 0.0
    %754 = vmatpush.msra.mxu0 0.0
    %755 = vmatpush.msra.mxu0 0.0
    %756 = vmatpush.msra.mxu0 0.0
    %757 = vmatpush.msra.mxu0 0.0
    %758 = vmatpush.msra.mxu0 %v740
    %759 = vmatpush.msra.mxu0 %v739
    %760 = vmatpush.msra.mxu0 %v738
    %761 = vmatpush.msra.mxu0 %v737
    %762 = vmatmul.f32.gmra.mxu0 %v744
    %v763 = vpop.f32.mrf.mxu0
    %v764 = vadd.f32 0.0, %v763
    %765 = vdwg.mxu0
    %766 = vrot.lane.b32.xlu0 %v727, 32
    %v767 = vpop.permute.xlu0 %766
    %v768 = vsel %vm148, %v767, 0
    %770 = vmatpush.msra.mxu0 0.0
    %771 = vmatpush.msra.mxu0 0.0
    %772 = vmatpush.msra.mxu0 0.0
    %773 = vmatpush.msra.mxu0 0.0
    %774 = vmatpush.msra.mxu0 0.0
    %775 = vmatpush.msra.mxu0 0.0
    %776 = vmatpush.msra.mxu0 0.0
    %777 = vmatpush.msra.mxu0 0.0
    %778 = vmatpush.msra.mxu0 0.0
    %779 = vmatpush.msra.mxu0 0.0
    %780 = vmatpush.msra.mxu0 0.0
    %781 = vmatpush.msra.mxu0 0.0
    %782 = vmatpush.msra.mxu0 %v736
    %783 = vmatpush.msra.mxu0 %v735
    %784 = vmatpush.msra.mxu0 %v734
    %785 = vmatpush.msra.mxu0 %v733
    %786 = vmatmul.f32.gmra.mxu0 %v768
    %v787 = vpop.f32.mrf.mxu0
    %v788 = vadd.f32 %v764, %v787
    %789 = vdwg.mxu0
    %v790 = vsub.f32 %v727, %v732
    %v791 = vld [vmem:[#allocation2 + $0x108] sm:$0xff]
    %v792 = vld [vmem:[#allocation2 + $0x110] sm:$0xff]
    %v793 = vld [vmem:[#allocation2 + $0x118] sm:$0xff]
    %v794 = vld [vmem:[#allocation2 + $0x120] sm:$0xff]
    %796 = vrot.lane.b32.xlu0 %v790, 32
    %v797 = vpop.permute.xlu0 %796
    %v798 = vsel %vm148, %v797, 0
    %800 = vmatpush.msra.mxu0 0.0
    %801 = vmatpush.msra.mxu0 0.0
    %802 = vmatpush.msra.mxu0 0.0
    %803 = vmatpush.msra.mxu0 0.0
    %804 = vmatpush.msra.mxu0 0.0
    %805 = vmatpush.msra.mxu0 0.0
    %806 = vmatpush.msra.mxu0 0.0
    %807 = vmatpush.msra.mxu0 0.0
    %808 = vmatpush.msra.mxu0 0.0
    %809 = vmatpush.msra.mxu0 0.0
    %810 = vmatpush.msra.mxu0 0.0
    %811 = vmatpush.msra.mxu0 0.0
    %812 = vmatpush.msra.mxu0 %v794
    %813 = vmatpush.msra.mxu0 %v793
    %814 = vmatpush.msra.mxu0 %v792
    %815 = vmatpush.msra.mxu0 %v791
    %816 = vmatmul.f32.gmra.mxu0 %v798
    %v817 = vpop.f32.mrf.mxu0
    %v818 = vadd.f32 0.0, %v817
    %819 = vdwg.mxu0
    %v820 = vadd.f32 %v788, %v818
    %v821 = vmul.f32 %v727, %v732
    %v822 = vld [vmem:[#allocation2 + $0x128] sm:$0xff]
    %v823 = vld [vmem:[#allocation2 + $0x130] sm:$0xff]
    %v824 = vld [vmem:[#allocation2 + $0x138] sm:$0xff]
    %v825 = vld [vmem:[#allocation2 + $0x140] sm:$0xff]
    %827 = vrot.lane.b32.xlu0 %v821, 32
    %v828 = vpop.permute.xlu0 %827
    %v829 = vsel %vm148, %v828, 0
    %831 = vmatpush.msra.mxu0 0.0
    %832 = vmatpush.msra.mxu0 0.0
    %833 = vmatpush.msra.mxu0 0.0
    %834 = vmatpush.msra.mxu0 0.0
    %835 = vmatpush.msra.mxu0 0.0
    %836 = vmatpush.msra.mxu0 0.0
    %837 = vmatpush.msra.mxu0 0.0
    %838 = vmatpush.msra.mxu0 0.0
    %839 = vmatpush.msra.mxu0 0.0
    %840 = vmatpush.msra.mxu0 0.0
    %841 = vmatpush.msra.mxu0 0.0
    %842 = vmatpush.msra.mxu0 0.0
    %843 = vmatpush.msra.mxu0 %v825
    %844 = vmatpush.msra.mxu0 %v824
    %845 = vmatpush.msra.mxu0 %v823
    %846 = vmatpush.msra.mxu0 %v822
    %847 = vmatmul.f32.gmra.mxu0 %v829
    %v848 = vpop.f32.mrf.mxu0
    %v849 = vadd.f32 0.0, %v848
    %850 = vdwg.mxu0
    %v851 = vadd.f32 %v820, %v849
    %v852 = vld [vmem:[#allocation2 + $0x148] sm:$0x1]
    %v853 = vperm.slane %v852, 0
    %v854 = vadd.f32 %v851, %v853
    %v855 = vmax.f32 %v854, 0.0
    %v856 = vld [vmem:[#allocation2 + $0x150] sm:$0xff]
    %v857 = vld [vmem:[#allocation2 + $0x158] sm:$0xff]
    %v858 = vld [vmem:[#allocation2 + $0x160] sm:$0xff]
    %v859 = vld [vmem:[#allocation2 + $0x168] sm:$0xff]
    %v860 = vld [vmem:[#allocation2 + $0x170] sm:$0x1]
    %v861 = vperm.slane %v860, 0
    %v863 = vsel %vm148, %v855, 0
    %865 = vmatpush.msra.mxu0 0.0
    %866 = vmatpush.msra.mxu0 0.0
    %867 = vmatpush.msra.mxu0 0.0
    %868 = vmatpush.msra.mxu0 0.0
    %869 = vmatpush.msra.mxu0 0.0
    %870 = vmatpush.msra.mxu0 0.0
    %871 = vmatpush.msra.mxu0 0.0
    %872 = vmatpush.msra.mxu0 0.0
    %873 = vmatpush.msra.mxu0 0.0
    %874 = vmatpush.msra.mxu0 0.0
    %875 = vmatpush.msra.mxu0 0.0
    %876 = vmatpush.msra.mxu0 0.0
    %877 = vmatpush.msra.mxu0 %v859
    %878 = vmatpush.msra.mxu0 %v858
    %879 = vmatpush.msra.mxu0 %v857
    %880 = vmatpush.msra.mxu0 %v856
    %881 = vmatmul.f32.gmra.mxu0 %v863
    %v882 = vpop.f32.mrf.mxu0
    %v883 = vadd.f32 %v861, %v882
    %884 = vdwg.mxu0
    %v885 = vmax.f32 %v883, 0.0
    %v886 = vld [vmem:[#allocation2 + $0x178] sm:$0xff]
    %v887 = vld [vmem:[#allocation2 + $0x180] sm:$0xff]
    %v888 = vld [vmem:[#allocation2 + $0x188] sm:$0xff]
    %v889 = vld [vmem:[#allocation2 + $0x190] sm:$0xff]
    %v890 = vld [vmem:[#allocation2 + $0x198] sm:$0x1]
    %v891 = vperm.slane %v890, 0
    %v893 = vsel %vm148, %v885, 0
    %895 = vmatpush.msra.mxu0 0.0
    %896 = vmatpush.msra.mxu0 0.0
    %897 = vmatpush.msra.mxu0 0.0
    %898 = vmatpush.msra.mxu0 0.0
    %899 = vmatpush.msra.mxu0 0.0
    %900 = vmatpush.msra.mxu0 0.0
    %901 = vmatpush.msra.mxu0 0.0
    %902 = vmatpush.msra.mxu0 0.0
    %903 = vmatpush.msra.mxu0 0.0
    %904 = vmatpush.msra.mxu0 0.0
    %905 = vmatpush.msra.mxu0 0.0
    %906 = vmatpush.msra.mxu0 0.0
    %907 = vmatpush.msra.mxu0 %v889
    %908 = vmatpush.msra.mxu0 %v888
    %909 = vmatpush.msra.mxu0 %v887
    %910 = vmatpush.msra.mxu0 %v886
    %911 = vmatmul.f32.gmra.mxu0 %v893
    %v912 = vpop.f32.mrf.mxu0
    %v913 = vadd.f32 %v891, %v912
    %914 = vdwg.mxu0
    %915 = vmax.xlane.f32.xlu0 %v913
    %v916 = vpop.xlane.xlu0 %915
    %v917 = vsub.f32 %v913, %v916
    %v918 = vmul.f32 %v917, 1.442695
    %v919 = vpow.pop %v918
    %920 = vadd.xlane.f32.xlu0 %v919
    %v921 = vpop.xlane.xlu0 %920
    %v922 = vlog2.pop %v921
    %v923 = vmul.f32 %v922, 0.6931472
    %v924 = vsub.f32 %v917, %v923
    %925 = vst [vmem:[%s2] sm:$0xff] %v924
    // Predicated region
    $region14: #{_lambda_.1} parent=1 // pred_check
      _
    $region15: #{_lambda_.1} parent=1 // pred_check_branch
      %927 = sbr.rel (0) target = $region17
    $region16: #{_lambda_.1} parent=1 // pred_region
      _
    $region17: #{_lambda_.1} parent=1 // pred_fallthru
      _
    // Predicated region
    $region18: #{_lambda_.1} parent=1 // pred_check
      _
    $region19: #{_lambda_.1} parent=1 // pred_check_branch
      %929 = sbr.rel (0) target = $region21
    $region20: #{_lambda_.1} parent=1 // pred_region
      _
    $region21: #{_lambda_.1} parent=1 // pred_fallthru
      _
    %930 = vsyncpa [#allocation3], 1

</llo_original>
